<compile_context>
chip_gen: v7x
topology: tpu7x:2x2x1
jax: 0.10.0
libtpu: 0.0.40
codegen_flags: <defaults>
</compile_context>

<pallas_src>
import functools

import jax
import jax.numpy as jnp
from jax.experimental import pallas as pl
from jax.experimental.pallas import tpu as pltpu


def _fused_bayes_linear_kernel(
    x_ref,      # (B, D_in)        resident across grid steps
    wmu_ref,    # (D_in, L)        tiled weight mean,  L = S_blk * D_out
    wsig_ref,   # (D_in, L)        tiled weight sigma (pre-exponentiated)
    bmu_ref,    # (1, L)           tiled bias mean
    bsig_ref,   # (1, L)           tiled bias sigma
    epsw_ref,   # (1, D_in, L)     this sample-block's weight noise
    epsb_ref,   # (1, 1, L)        this sample-block's bias noise
    y_ref,      # (1, B, L)        fused, lane-dense output block
    *,
    matmul_dtype,
):
    # Reparameterized weights for every sample of this block, one f32 VPU pass.
    # Layout is already (D_in, S_blk*D_out): no in-kernel transpose needed and
    # the matmul output is lane-dense.
    w = wmu_ref[...] + wsig_ref[...] * epsw_ref[0]     # (D_in, L)
    b = bmu_ref[...] + bsig_ref[...] * epsb_ref[0]     # (1, L)

    # Single MXU matmul covering all S_blk samples: (B, D_in) @ (D_in, L).
    y = jnp.dot(
        x_ref[...].astype(matmul_dtype),
        w.astype(matmul_dtype),
        preferred_element_type=jnp.float32,
    )
    y_ref[0] = (y + b).astype(y_ref.dtype)


def _pick_sample_block(samples, d_out):
    """Largest divisor of `samples` not exceeding ceil(128 / d_out).

    Targets >= 128 output lanes per grid step (unmasked stores) without
    blowing up VMEM for the per-block noise slab.
    """
    target = max(1, -(-128 // d_out))
    best = 1
    for cand in range(1, min(samples, target) + 1):
        if samples % cand == 0:
            best = cand
    return best


@functools.partial(
    jax.jit, static_argnames=("samples", "sample_block", "use_bf16_matmul")
)
def parallel_sampling_forward(
    x, w_mu, w_logsigma, b_mu, b_logsigma, eps_w, eps_b,
    *, samples, sample_block=None, use_bf16_matmul=True,
):
    """ParallelSamplingWrapper.forward equivalent.

    Returns (outputs, kl):
      outputs: [samples, B, D_out]  -- stacked per-sample module outputs
      kl:      scalar               -- sum of per-sample KLs / samples
    """
    B, D_in = x.shape
    D_out = w_mu.shape[0]
    S = samples
    S_blk = sample_block if sample_block is not None else _pick_sample_block(S, D_out)
    assert S % S_blk == 0, "sample block size must divide the number of samples"
    n_blk = S // S_blk
    L = S_blk * D_out
    f32 = jnp.float32

    # ---- sample-invariant prep: done ONCE in XLA (hoisted out of the kernel) ----
    w_sigma = jnp.exp(w_logsigma)                              # (D_out, D_in)
    b_sigma = jnp.exp(b_logsigma)                              # (D_out,)
    # (D_in, D_out) layout (no in-kernel transpose), tiled S_blk times on lanes.
    wmu_t = jnp.tile(w_mu.T, (1, S_blk)).astype(f32)           # (D_in, L)
    wsig_t = jnp.tile(w_sigma.T, (1, S_blk)).astype(f32)       # (D_in, L)
    bmu_t = jnp.tile(b_mu.reshape(1, D_out), (1, S_blk)).astype(f32)    # (1, L)
    bsig_t = jnp.tile(b_sigma.reshape(1, D_out), (1, S_blk)).astype(f32)  # (1, L)

    # Noise re-laid-out so each grid step reads one contiguous (D_in, L) slab:
    #   eps_w_f[blk, d_in, s*D_out + o] = eps_w[blk*S_blk + s, o, d_in]
    eps_w_f = (
        eps_w.reshape(n_blk, S_blk, D_out, D_in)
        .transpose(0, 3, 1, 2)
        .reshape(n_blk, D_in, L)
        .astype(f32)
    )
    eps_b_f = eps_b.reshape(n_blk, 1, L).astype(f32)

    matmul_dtype = jnp.bfloat16 if use_bf16_matmul else jnp.float32
    kernel = functools.partial(_fused_bayes_linear_kernel, matmul_dtype=matmul_dtype)

    y_blocks = pl.pallas_call(
        kernel,
        out_shape=jax.ShapeDtypeStruct((n_blk, B, L), jnp.float32),
        grid=(n_blk,),
        in_specs=[
            pl.BlockSpec((B, D_in), lambda i: (0, 0)),        # x (VMEM-resident)
            pl.BlockSpec((D_in, L), lambda i: (0, 0)),        # tiled w_mu
            pl.BlockSpec((D_in, L), lambda i: (0, 0)),        # tiled w_sigma
            pl.BlockSpec((1, L), lambda i: (0, 0)),           # tiled b_mu
            pl.BlockSpec((1, L), lambda i: (0, 0)),           # tiled b_sigma
            pl.BlockSpec((1, D_in, L), lambda i: (i, 0, 0)),  # eps_w per block
            pl.BlockSpec((1, 1, L), lambda i: (i, 0, 0)),     # eps_b per block
        ],
        out_specs=pl.BlockSpec((1, B, L), lambda i: (i, 0, 0)),
        compiler_params=pltpu.CompilerParams(
            dimension_semantics=("parallel",),
            vmem_limit_bytes=32 * 1024 * 1024,
        ),
    )(x, wmu_t, wsig_t, bmu_t, bsig_t, eps_w_f, eps_b_f)

    # Un-fold the fused lane axis: (n_blk, B, S_blk*D_out) -> (S, B, D_out).
    outputs = (
        y_blocks.reshape(n_blk, B, S_blk, D_out)
        .transpose(0, 2, 1, 3)
        .reshape(S, B, D_out)
    )

    # KL(N(mu, sigma^2) || N(0,1)) has no dependence on eps, so the S identical
    # per-sample KLs summed and divided by S collapse to a single evaluation.
    kl = 0.5 * (
        jnp.sum(w_sigma * w_sigma + w_mu * w_mu - 1.0 - 2.0 * w_logsigma)
        + jnp.sum(b_sigma * b_sigma + b_mu * b_mu - 1.0 - 2.0 * b_logsigma)
    )
    return outputs, kl


def reference_forward(
    x, w_mu, w_logsigma, b_mu, b_logsigma, eps_w, eps_b, samples, use_bf16_matmul=True
):
    """Pure-JAX reference of the wrapper semantics (same matmul precision)."""
    w_sigma = jnp.exp(w_logsigma)
    b_sigma = jnp.exp(b_logsigma)
    w = w_mu[None] + w_sigma[None] * eps_w                     # (S, D_out, D_in)
    b = b_mu[None] + b_sigma[None] * eps_b                     # (S, D_out)
    md = jnp.bfloat16 if use_bf16_matmul else jnp.float32
    y = jnp.einsum(
        "bi,soi->sbo", x.astype(md), w.astype(md), preferred_element_type=jnp.float32
    ) + b[:, None, :]
    kl_one = 0.5 * (
        jnp.sum(w_sigma**2 + w_mu**2 - 1.0 - 2.0 * w_logsigma)
        + jnp.sum(b_sigma**2 + b_mu**2 - 1.0 - 2.0 * b_logsigma)
    )
    kl = (kl_one * samples) / samples
    return y, kl


if __name__ == "__main__":
    # Small, deterministic problem: 8 samples of a (128 -> 32) Bayesian linear
    # layer on a batch of 8.  S_blk=4 -> fused output lanes = 4*32 = 128
    # (lane-dense stores), grid of 2 sample blocks.
    S, B, D_in, D_out = 8, 8, 128, 32

    key = jax.random.PRNGKey(0)
    k_x, k_wm, k_wl, k_bm, k_bl, k_ew, k_eb = jax.random.split(key, 7)

    x = jax.random.normal(k_x, (B, D_in), dtype=jnp.float32)

    # Deterministic "Bayesian linear" parameter init (synthetic, no checkpoint).
    w_mu = 0.1 * jax.random.normal(k_wm, (D_out, D_in), dtype=jnp.float32)
    w_logsigma = -3.0 + 0.05 * jax.random.normal(k_wl, (D_out, D_in), dtype=jnp.float32)
    b_mu = 0.1 * jax.random.normal(k_bm, (D_out,), dtype=jnp.float32)
    b_logsigma = -3.0 + 0.05 * jax.random.normal(k_bl, (D_out,), dtype=jnp.float32)

    # Per-sample reparameterization noise (the wrapper's "parallel sampling").
    eps_w = jax.random.normal(k_ew, (S, D_out, D_in), dtype=jnp.float32)
    eps_b = jax.random.normal(k_eb, (S, D_out), dtype=jnp.float32)

    outputs, kl = parallel_sampling_forward(
        x, w_mu, w_logsigma, b_mu, b_logsigma, eps_w, eps_b, samples=S
    )
    outputs = jax.block_until_ready(outputs)
    kl = jax.block_until_ready(kl)

    # Sanity check against the pure-JAX reference (same bf16-operand matmul).
    ref_out, ref_kl = reference_forward(
        x, w_mu, w_logsigma, b_mu, b_logsigma, eps_w, eps_b, S
    )
    assert outputs.shape == (S, B, D_out)
    assert jnp.allclose(outputs, ref_out, atol=2e-2, rtol=2e-2)
    assert jnp.allclose(kl, ref_kl, atol=1e-3, rtol=1e-4)

    print("KERNEL_OK")
</pallas_src>

<mosaic_0001>
module attributes {stable_mosaic.version = 11 : i64} {
  func.func @_fused_bayes_linear_kernel(%arg0: i32, %arg1: memref<8x128xf32, #tpu.memory_space<vmem>>, %arg2: memref<128x128xf32, #tpu.memory_space<vmem>>, %arg3: memref<128x128xf32, #tpu.memory_space<vmem>>, %arg4: memref<1x128xf32, #tpu.memory_space<vmem>>, %arg5: memref<1x128xf32, #tpu.memory_space<vmem>>, %arg6: memref<1x128x128xf32, #tpu.memory_space<vmem>>, %arg7: memref<1x1x128xf32, #tpu.memory_space<vmem>>, %arg8: memref<1x8x128xf32, #tpu.memory_space<vmem>>) attributes {dimension_semantics = [#tpu.dimension_semantics<parallel>], iteration_bounds = array<i64: 2>, scalar_prefetch = 0 : i64, scratch_operands = 0 : i64, tpu.core_type = #tpu.core_type<tc>, window_params = [{pipeline_mode = #tpu.pipeline_mode<synchronous>, transform_indices = @transform_0, window_bounds = array<i64: 8, 128>}, {pipeline_mode = #tpu.pipeline_mode<synchronous>, transform_indices = @transform_1, window_bounds = array<i64: 128, 128>}, {pipeline_mode = #tpu.pipeline_mode<synchronous>, transform_indices = @transform_2, window_bounds = array<i64: 128, 128>}, {pipeline_mode = #tpu.pipeline_mode<synchronous>, transform_indices = @transform_3, window_bounds = array<i64: 1, 128>}, {pipeline_mode = #tpu.pipeline_mode<synchronous>, transform_indices = @transform_4, window_bounds = array<i64: 1, 128>}, {transform_indices = @transform_5, window_bounds = array<i64: 1, 128, 128>}, {transform_indices = @transform_6, window_bounds = array<i64: 1, 1, 128>}, {transform_indices = @transform_7, window_bounds = array<i64: 1, 8, 128>}]} {
    %c0 = arith.constant 0 : index
    %c0_0 = arith.constant 0 : index
    %0 = vector.load %arg2[%c0, %c0_0] : memref<128x128xf32, #tpu.memory_space<vmem>>, vector<128x128xf32>
    %c0_1 = arith.constant 0 : index
    %c0_2 = arith.constant 0 : index
    %1 = vector.load %arg3[%c0_1, %c0_2] : memref<128x128xf32, #tpu.memory_space<vmem>>, vector<128x128xf32>
    %c0_3 = arith.constant 0 : index
    %c0_4 = arith.constant 0 : index
    %c0_5 = arith.constant 0 : index
    %2 = vector.load %arg6[%c0_3, %c0_4, %c0_5] : memref<1x128x128xf32, #tpu.memory_space<vmem>>, vector<1x128x128xf32>
    %3 = vector.shape_cast %2 : vector<1x128x128xf32> to vector<128x128xf32>
    %4 = arith.mulf %1, %3 : vector<128x128xf32>
    %5 = arith.addf %0, %4 : vector<128x128xf32>
    %c0_6 = arith.constant 0 : index
    %c0_7 = arith.constant 0 : index
    %6 = vector.load %arg4[%c0_6, %c0_7] : memref<1x128xf32, #tpu.memory_space<vmem>>, vector<1x128xf32>
    %c0_8 = arith.constant 0 : index
    %c0_9 = arith.constant 0 : index
    %7 = vector.load %arg5[%c0_8, %c0_9] : memref<1x128xf32, #tpu.memory_space<vmem>>, vector<1x128xf32>
    %c0_10 = arith.constant 0 : index
    %c0_11 = arith.constant 0 : index
    %c0_12 = arith.constant 0 : index
    %8 = vector.load %arg7[%c0_10, %c0_11, %c0_12] : memref<1x1x128xf32, #tpu.memory_space<vmem>>, vector<1x1x128xf32>
    %9 = vector.shape_cast %8 : vector<1x1x128xf32> to vector<1x128xf32>
    %10 = arith.mulf %7, %9 : vector<1x128xf32>
    %11 = arith.addf %6, %10 : vector<1x128xf32>
    %c0_13 = arith.constant 0 : index
    %c0_14 = arith.constant 0 : index
    %12 = vector.load %arg1[%c0_13, %c0_14] : memref<8x128xf32, #tpu.memory_space<vmem>>, vector<8x128xf32>
    %13 = arith.truncf %12 : vector<8x128xf32> to vector<8x128xbf16>
    %14 = arith.truncf %5 : vector<128x128xf32> to vector<128x128xbf16>
    %cst = arith.constant dense<0.000000e+00> : vector<8x128xf32>
    %15 = tpu.matmul %13, %14, %cst {dimension_numbers = #tpu.dot_dimension_numbers<[1], [0], [0], [1], [0, 0, 1, 1], [], []>} : vector<8x128xbf16>, vector<128x128xbf16>, vector<8x128xf32> -> vector<8x128xf32>
    %16 = vector.broadcast %11 : vector<1x128xf32> to vector<8x128xf32>
    %17 = arith.addf %15, %16 : vector<8x128xf32>
    %c0_15 = arith.constant 0 : index
    %c0_16 = arith.constant 0 : index
    %c0_17 = arith.constant 0 : index
    %18 = vector.load %arg8[%c0_15, %c0_16, %c0_17] : memref<1x8x128xf32, #tpu.memory_space<vmem>>, vector<1x8x128xf32>
    %19 = vector.shape_cast %18 : vector<1x8x128xf32> to vector<8x128xf32>
    %20 = vector.shape_cast %17 : vector<8x128xf32> to vector<1x8x128xf32>
    tpu.vector_store %arg8[%c0_15, %c0_16, %c0_17], %20 {strides = array<i32>} : memref<1x8x128xf32, #tpu.memory_space<vmem>>, vector<1x8x128xf32>,
    return
  }
  func.func @transform_0(%arg0: i32) -> (i32, i32) {
    %c0_i32 = arith.constant 0 : i32
    %c0_i32_0 = arith.constant 0 : i32
    %c0_i32_1 = arith.constant 0 : i32
    return %c0_i32, %c0_i32_0 : i32, i32
  }
  func.func @transform_1(%arg0: i32) -> (i32, i32) {
    %c0_i32 = arith.constant 0 : i32
    %c0_i32_0 = arith.constant 0 : i32
    %c0_i32_1 = arith.constant 0 : i32
    return %c0_i32, %c0_i32_0 : i32, i32
  }
  func.func @transform_2(%arg0: i32) -> (i32, i32) {
    %c0_i32 = arith.constant 0 : i32
    %c0_i32_0 = arith.constant 0 : i32
    %c0_i32_1 = arith.constant 0 : i32
    return %c0_i32, %c0_i32_0 : i32, i32
  }
  func.func @transform_3(%arg0: i32) -> (i32, i32) {
    %c0_i32 = arith.constant 0 : i32
    %c0_i32_0 = arith.constant 0 : i32
    %c0_i32_1 = arith.constant 0 : i32
    return %c0_i32, %c0_i32_0 : i32, i32
  }
  func.func @transform_4(%arg0: i32) -> (i32, i32) {
    %c0_i32 = arith.constant 0 : i32
    %c0_i32_0 = arith.constant 0 : i32
    %c0_i32_1 = arith.constant 0 : i32
    return %c0_i32, %c0_i32_0 : i32, i32
  }
  func.func @transform_5(%arg0: i32) -> (i32, i32, i32) {
    %c0_i32 = arith.constant 0 : i32
    %c0_i32_0 = arith.constant 0 : i32
    %c0_i32_1 = arith.constant 0 : i32
    return %arg0, %c0_i32, %c0_i32_0 : i32, i32, i32
  }
  func.func @transform_6(%arg0: i32) -> (i32, i32, i32) {
    %c0_i32 = arith.constant 0 : i32
    %c0_i32_0 = arith.constant 0 : i32
    %c0_i32_1 = arith.constant 0 : i32
    return %arg0, %c0_i32, %c0_i32_0 : i32, i32, i32
  }
  func.func @transform_7(%arg0: i32) -> (i32, i32, i32) {
    %c0_i32 = arith.constant 0 : i32
    %c0_i32_0 = arith.constant 0 : i32
    %c0_i32_1 = arith.constant 0 : i32
    return %arg0, %c0_i32, %c0_i32_0 : i32, i32, i32
  }
}

</mosaic_0001>

<llo_original>
// kernel: parallel_sampling_forward.1
$region0: #{parallel_sampling_forward.1}
  #allocation0 [shape = 'u32[]', space=smem, size = 0x4, offset = 0x4, fixed_abs, tag = 'smem constant byte address 0x4 - core index']
  #allocation1 [shape = 'u32[144,128]{1,0:T(1,128)}', space=vmem, size = 0x12000, scoped, tag = 'internal scratch']
  %s0 = inlined_call_operand.vmem [shape: f32[8,128], index: 0, kind: input, shape index: {}]
  %s1 = inlined_call_operand.vmem [shape: f32[128,128], index: 1, kind: input, shape index: {}]
  %s2 = inlined_call_operand.vmem [shape: f32[128,128], index: 2, kind: input, shape index: {}]
  %s3 = inlined_call_operand.vmem [shape: f32[1,128], index: 3, kind: input, shape index: {}]
  %s4 = inlined_call_operand.vmem [shape: f32[1,128], index: 4, kind: input, shape index: {}]
  %s5 = inlined_call_operand.vmem [shape: f32[2,128,128], index: 5, kind: input, shape index: {}]
  %s6 = inlined_call_operand.vmem [shape: f32[2,1,128], index: 6, kind: input, shape index: {}]
  %s7 = inlined_call_operand.vmem [shape: f32[2,8,128], index: 7, kind: output, shape index: {}]
  %s8 = sld [smem:[#allocation0]]
  $region61: #{parallel_sampling_forward.1} parent=0
    _
  %s10 = ssub.s32 1, %s8
  %s11 = scalar_select 0, %s10, %s8
  loop: start=0, step=1, limit=4
  $region2: #{parallel_sampling_forward.1} parent=0 // loop_pre_header
    _
  $region3: #{parallel_sampling_forward.1} parent=0 // loop_header
    %s13 = sphi 0, %s17
    %p14 = scmp.ge.s32.totalorder %s13, 4
    %s21 = sphi 0, %s21
    %s23 = sphi 0, %s21
    %s24 = sphi 0, %s23
    %s38 = sphi 0, %s24
    %s42 = sphi 0, %s42
    %s44 = sphi 0, %s42
    %s45 = sphi 0, %s44
    %s59 = sphi 0, %s45
    %s63 = sphi 0, %s63
    %s65 = sphi 0, %s63
    %s66 = sphi 0, %s65
    %s80 = sphi 0, %s66
    %s84 = sphi 0, %s84
    %s86 = sphi 0, %s84
    %s87 = sphi 0, %s86
    %s101 = sphi 0, %s87
    %s105 = sphi 0, %s105
    %s107 = sphi 0, %s105
    %s108 = sphi 0, %s107
    %s122 = sphi 0, %s108
    %s128 = sphi 0, %s130
    %s131 = sphi 0, %s128
    %s132 = sphi 0, %s131
    %s148 = sphi 0, %s132
    %s154 = sphi 0, %s156
    %s157 = sphi 0, %s154
    %s158 = sphi 0, %s157
    %s174 = sphi 0, %s158
    %s180 = sphi 0, %s182
    %s183 = sphi 0, %s180
    %s184 = sphi 0, %s183
    %s200 = sphi 0, %s184
  $region4: #{parallel_sampling_forward.1} parent=0 // loop_header_branch
    %16 = sbr.rel (%p14) target = $region8
  $region5: #{parallel_sampling_forward.1} parent=0 // loop_body
    %s18 = ssub.s32 %s13, 1
    %s19 = ssub.s32 %s13, 2
    %s20 = sadd.s32 %s13, 1
    %s22 = sadd.s32 %s21, 1
    %p25 = scmp.eq.s32.totalorder %s13, 1
    %p26 = scmp.ne.s32.totalorder %s21, %s23
    %p27 = scmp.eq.s32.totalorder %s13, 0
    %p28 = por %p26, %p27
    %p29 = scmp.ne.s32.totalorder %s21, %s23
    %p30 = scmp.eq.s32.totalorder %s18, 1
    %p31 = por %p29, %p30
    %p32 = scmp.ne.s32.totalorder %s23, %s24
    %p33 = scmp.eq.s32.totalorder %s18, 0
    %p34 = por %p32, %p33
    %p35 = scmp.ne.s32.totalorder %s23, %s24
    %p36 = scmp.eq.s32.totalorder %s19, 1
    %p37 = por %p35, %p36
    %p39 = scmp.ne.s32.totalorder %s24, %s38
    %p40 = scmp.eq.s32.totalorder %s19, 0
    %p41 = por %p39, %p40
    %s43 = sadd.s32 %s42, 1
    %p46 = scmp.eq.s32.totalorder %s13, 1
    %p47 = scmp.ne.s32.totalorder %s42, %s44
    %p48 = scmp.eq.s32.totalorder %s13, 0
    %p49 = por %p47, %p48
    %p50 = scmp.ne.s32.totalorder %s42, %s44
    %p51 = scmp.eq.s32.totalorder %s18, 1
    %p52 = por %p50, %p51
    %p53 = scmp.ne.s32.totalorder %s44, %s45
    %p54 = scmp.eq.s32.totalorder %s18, 0
    %p55 = por %p53, %p54
    %p56 = scmp.ne.s32.totalorder %s44, %s45
    %p57 = scmp.eq.s32.totalorder %s19, 1
    %p58 = por %p56, %p57
    %p60 = scmp.ne.s32.totalorder %s45, %s59
    %p61 = scmp.eq.s32.totalorder %s19, 0
    %p62 = por %p60, %p61
    %s64 = sadd.s32 %s63, 1
    %p67 = scmp.eq.s32.totalorder %s13, 1
    %p68 = scmp.ne.s32.totalorder %s63, %s65
    %p69 = scmp.eq.s32.totalorder %s13, 0
    %p70 = por %p68, %p69
    %p71 = scmp.ne.s32.totalorder %s63, %s65
    %p72 = scmp.eq.s32.totalorder %s18, 1
    %p73 = por %p71, %p72
    %p74 = scmp.ne.s32.totalorder %s65, %s66
    %p75 = scmp.eq.s32.totalorder %s18, 0
    %p76 = por %p74, %p75
    %p77 = scmp.ne.s32.totalorder %s65, %s66
    %p78 = scmp.eq.s32.totalorder %s19, 1
    %p79 = por %p77, %p78
    %p81 = scmp.ne.s32.totalorder %s66, %s80
    %p82 = scmp.eq.s32.totalorder %s19, 0
    %p83 = por %p81, %p82
    %s85 = sadd.s32 %s84, 1
    %p88 = scmp.eq.s32.totalorder %s13, 1
    %p89 = scmp.ne.s32.totalorder %s84, %s86
    %p90 = scmp.eq.s32.totalorder %s13, 0
    %p91 = por %p89, %p90
    %p92 = scmp.ne.s32.totalorder %s84, %s86
    %p93 = scmp.eq.s32.totalorder %s18, 1
    %p94 = por %p92, %p93
    %p95 = scmp.ne.s32.totalorder %s86, %s87
    %p96 = scmp.eq.s32.totalorder %s18, 0
    %p97 = por %p95, %p96
    %p98 = scmp.ne.s32.totalorder %s86, %s87
    %p99 = scmp.eq.s32.totalorder %s19, 1
    %p100 = por %p98, %p99
    %p102 = scmp.ne.s32.totalorder %s87, %s101
    %p103 = scmp.eq.s32.totalorder %s19, 0
    %p104 = por %p102, %p103
    %s106 = sadd.s32 %s105, 1
    %p109 = scmp.eq.s32.totalorder %s13, 1
    %p110 = scmp.ne.s32.totalorder %s105, %s107
    %p111 = scmp.eq.s32.totalorder %s13, 0
    %p112 = por %p110, %p111
    %p113 = scmp.ne.s32.totalorder %s105, %s107
    %p114 = scmp.eq.s32.totalorder %s18, 1
    %p115 = por %p113, %p114
    %p116 = scmp.ne.s32.totalorder %s107, %s108
    %p117 = scmp.eq.s32.totalorder %s18, 0
    %p118 = por %p116, %p117
    %p119 = scmp.ne.s32.totalorder %s107, %s108
    %p120 = scmp.eq.s32.totalorder %s19, 1
    %p121 = por %p119, %p120
    %p123 = scmp.ne.s32.totalorder %s108, %s122
    %p124 = scmp.eq.s32.totalorder %s19, 0
    %p125 = por %p123, %p124
    %s126 = ssub.s32 %s13, %s20
    %p127 = scmp.eq.s32.totalorder %s126, 0
    %s129 = sadd.s32 %s128, 1
    %s130 = scalar_select %p127, %s128, %s129
    %p133 = pneg %p127
    %p134 = scmp.eq.s32.totalorder %s13, 1
    %p135 = por %p133, %p134
    %p136 = scmp.ne.s32.totalorder %s128, %s131
    %p137 = scmp.eq.s32.totalorder %s13, 0
    %p138 = por %p136, %p137
    %p139 = scmp.ne.s32.totalorder %s128, %s131
    %p140 = scmp.eq.s32.totalorder %s18, 1
    %p141 = por %p139, %p140
    %p142 = scmp.ne.s32.totalorder %s131, %s132
    %p143 = scmp.eq.s32.totalorder %s18, 0
    %p144 = por %p142, %p143
    %p145 = scmp.ne.s32.totalorder %s131, %s132
    %p146 = scmp.eq.s32.totalorder %s19, 1
    %p147 = por %p145, %p146
    %p149 = scmp.ne.s32.totalorder %s132, %s148
    %p150 = scmp.eq.s32.totalorder %s19, 0
    %p151 = por %p149, %p150
    %s152 = ssub.s32 %s13, %s20
    %p153 = scmp.eq.s32.totalorder %s152, 0
    %s155 = sadd.s32 %s154, 1
    %s156 = scalar_select %p153, %s154, %s155
    %p159 = pneg %p153
    %p160 = scmp.eq.s32.totalorder %s13, 1
    %p161 = por %p159, %p160
    %p162 = scmp.ne.s32.totalorder %s154, %s157
    %p163 = scmp.eq.s32.totalorder %s13, 0
    %p164 = por %p162, %p163
    %p165 = scmp.ne.s32.totalorder %s154, %s157
    %p166 = scmp.eq.s32.totalorder %s18, 1
    %p167 = por %p165, %p166
    %p168 = scmp.ne.s32.totalorder %s157, %s158
    %p169 = scmp.eq.s32.totalorder %s18, 0
    %p170 = por %p168, %p169
    %p171 = scmp.ne.s32.totalorder %s157, %s158
    %p172 = scmp.eq.s32.totalorder %s19, 1
    %p173 = por %p171, %p172
    %p175 = scmp.ne.s32.totalorder %s158, %s174
    %p176 = scmp.eq.s32.totalorder %s19, 0
    %p177 = por %p175, %p176
    %s178 = ssub.s32 %s13, %s20
    %p179 = scmp.eq.s32.totalorder %s178, 0
    %s181 = sadd.s32 %s180, 1
    %s182 = scalar_select %p179, %s180, %s181
    %p185 = pneg %p179
    %p186 = scmp.eq.s32.totalorder %s13, 1
    %p187 = por %p185, %p186
    %p188 = scmp.ne.s32.totalorder %s180, %s183
    %p189 = scmp.eq.s32.totalorder %s13, 0
    %p190 = por %p188, %p189
    %p191 = scmp.ne.s32.totalorder %s180, %s183
    %p192 = scmp.eq.s32.totalorder %s18, 1
    %p193 = por %p191, %p192
    %p194 = scmp.ne.s32.totalorder %s183, %s184
    %p195 = scmp.eq.s32.totalorder %s18, 0
    %p196 = por %p194, %p195
    %p197 = scmp.ne.s32.totalorder %s183, %s184
    %p198 = scmp.eq.s32.totalorder %s19, 1
    %p199 = por %p197, %p198
    %p201 = scmp.ne.s32.totalorder %s184, %s200
    %p202 = scmp.eq.s32.totalorder %s19, 0
    %p203 = por %p201, %p202
    %p204 = scmp.le.s32.totalorder 1, %s13
    %p205 = scmp.lt.s32.totalorder %s13, 3
    %p206 = pnand %p204, %p205
    %p207 = pneg %p206
    // Predicated region
    $region9: #{parallel_sampling_forward.1} parent=5 // pred_check
      _
    $region10: #{parallel_sampling_forward.1} parent=5 // pred_check_branch
      %209 = sbr.rel (%p206) target = $region12
    $region11: #{parallel_sampling_forward.1} parent=5 // pred_region
      %s210 = ssub.s32 %s13, 1
      // Predicated region
      $region13: #{parallel_sampling_forward.1} parent=11 // pred_check
        %p211 = pneg %p34
      $region14: #{parallel_sampling_forward.1} parent=11 // pred_check_branch
        %213 = sbr.rel (%p211) target = $region16
      $region15: #{parallel_sampling_forward.1} parent=11 // pred_region
        _
      $region16: #{parallel_sampling_forward.1} parent=11 // pred_fallthru
        _
      // Predicated region
      $region17: #{parallel_sampling_forward.1} parent=11 // pred_check
        %p214 = pneg %p55
      $region18: #{parallel_sampling_forward.1} parent=11 // pred_check_branch
        %216 = sbr.rel (%p214) target = $region20
      $region19: #{parallel_sampling_forward.1} parent=11 // pred_region
        _
      $region20: #{parallel_sampling_forward.1} parent=11 // pred_fallthru
        _
      // Predicated region
      $region21: #{parallel_sampling_forward.1} parent=11 // pred_check
        %p217 = pneg %p76
      $region22: #{parallel_sampling_forward.1} parent=11 // pred_check_branch
        %219 = sbr.rel (%p217) target = $region24
      $region23: #{parallel_sampling_forward.1} parent=11 // pred_region
        _
      $region24: #{parallel_sampling_forward.1} parent=11 // pred_fallthru
        _
      // Predicated region
      $region25: #{parallel_sampling_forward.1} parent=11 // pred_check
        %p220 = pneg %p97
      $region26: #{parallel_sampling_forward.1} parent=11 // pred_check_branch
        %222 = sbr.rel (%p220) target = $region28
      $region27: #{parallel_sampling_forward.1} parent=11 // pred_region
        _
      $region28: #{parallel_sampling_forward.1} parent=11 // pred_fallthru
        _
      // Predicated region
      $region29: #{parallel_sampling_forward.1} parent=11 // pred_check
        %p223 = pneg %p118
      $region30: #{parallel_sampling_forward.1} parent=11 // pred_check_branch
        %225 = sbr.rel (%p223) target = $region32
      $region31: #{parallel_sampling_forward.1} parent=11 // pred_region
        _
      $region32: #{parallel_sampling_forward.1} parent=11 // pred_fallthru
        _
    $region12: #{parallel_sampling_forward.1} parent=5 // pred_fallthru
      _
    %p226 = scmp.lt.s32.totalorder %s13, 2
    // Predicated region
    $region33: #{parallel_sampling_forward.1} parent=5 // pred_check
      %p227 = pneg %p226
    $region34: #{parallel_sampling_forward.1} parent=5 // pred_check_branch
      %229 = sbr.rel (%p227) target = $region36
    $region35: #{parallel_sampling_forward.1} parent=5 // pred_region
      // Predicated region
      $region37: #{parallel_sampling_forward.1} parent=35 // pred_check
        %p230 = pneg %p138
      $region38: #{parallel_sampling_forward.1} parent=35 // pred_check_branch
        %232 = sbr.rel (%p230) target = $region40
      $region39: #{parallel_sampling_forward.1} parent=35 // pred_region
        %p233 = scmp.lt.s32.totalorder %s13, 1
        %s234 = scalar_select %p233, %s13, 1
        %s235 = smul.addr %s234, 16
        %s236 = smul.addr %s235, 8
        %s237 = scalar_lea.vmem %s5, %s236
      $region40: #{parallel_sampling_forward.1} parent=35 // pred_fallthru
        _
      // Predicated region
      $region41: #{parallel_sampling_forward.1} parent=35 // pred_check
        %p238 = pneg %p164
      $region42: #{parallel_sampling_forward.1} parent=35 // pred_check_branch
        %240 = sbr.rel (%p238) target = $region44
      $region43: #{parallel_sampling_forward.1} parent=35 // pred_region
        %p241 = scmp.lt.s32.totalorder %s13, 1
        %s242 = scalar_select %p241, %s13, 1
        %s243 = scalar_lea.vmem %s6, %s242
      $region44: #{parallel_sampling_forward.1} parent=35 // pred_fallthru
        _
    $region36: #{parallel_sampling_forward.1} parent=5 // pred_fallthru
      _
    %p244 = scmp.le.s32.totalorder 1, %s13
    %p245 = scmp.lt.s32.totalorder %s13, 3
    %p246 = pnand %p244, %p245
    %p247 = pneg %p246
    // Predicated region
    $region45: #{parallel_sampling_forward.1} parent=5 // pred_check
      _
    $region46: #{parallel_sampling_forward.1} parent=5 // pred_check_branch
      %249 = sbr.rel (%p246) target = $region48
    $region47: #{parallel_sampling_forward.1} parent=5 // pred_region
      %s250 = ssub.s32 %s13, 1
      %p251 = pneg %p34
      %p252 = pneg %p31
      %p253 = pneg %p55
      %p254 = pneg %p52
      %p255 = pneg %p76
      %p256 = pneg %p73
      %p257 = pneg %p97
      %p258 = pneg %p94
      %p259 = pneg %p118
      %p260 = pneg %p115
      %p261 = scmp.lt.s32.totalorder %s18, 1
      %s262 = scalar_select %p261, %s18, 1
      %s263 = smul.addr %s262, 16
      %s264 = smul.addr %s263, 8
      %s265 = scalar_lea.vmem %s5, %s264
      %p266 = pneg %p144
      %p267 = pneg %p141
      %p268 = scmp.lt.s32.totalorder %s18, 1
      %s269 = scalar_select %p268, %s18, 1
      %s270 = scalar_lea.vmem %s6, %s269
      %p271 = pneg %p170
      %p272 = pneg %p167
      %p273 = pneg %p196
      %p274 = pneg %p193
      %p275 = scmp.lt.s32.totalorder %s18, 1
      %s276 = scalar_select %p275, %s18, 1
      %s277 = smul.addr %s276, 8
      %s278 = scalar_lea.vmem %s7, %s277
      %p279 = scmp.lt.s32.totalorder %s18, 1
      %s280 = scalar_select %p279, %s18, 1
      %s281 = smul.addr %s280, 16
      %s282 = smul.addr %s281, 8
      %s283 = scalar_lea.vmem %s5, %s282
      %p284 = scmp.lt.s32.totalorder %s18, 1
      %s285 = scalar_select %p284, %s18, 1
      %s286 = scalar_lea.vmem %s6, %s285
      %p287 = scmp.lt.s32.totalorder %s18, 1
      %s288 = scalar_select %p287, %s18, 1
      %s289 = smul.addr %s288, 8
      %s290 = scalar_lea.vmem %s7, %s289
      %v292 = vld [vmem:[%s1] sm:$0xff]
      %v293 = vld [vmem:[%s1 + $0x8] sm:$0xff]
      %v294 = vld [vmem:[%s1 + $0x10] sm:$0xff]
      %v295 = vld [vmem:[%s1 + $0x18] sm:$0xff]
      %v296 = vld [vmem:[%s1 + $0x20] sm:$0xff]
      %v297 = vld [vmem:[%s1 + $0x28] sm:$0xff]
      %v298 = vld [vmem:[%s1 + $0x30] sm:$0xff]
      %v299 = vld [vmem:[%s1 + $0x38] sm:$0xff]
      %v300 = vld [vmem:[%s1 + $0x40] sm:$0xff]
      %v301 = vld [vmem:[%s1 + $0x48] sm:$0xff]
      %v302 = vld [vmem:[%s1 + $0x50] sm:$0xff]
      %v303 = vld [vmem:[%s1 + $0x58] sm:$0xff]
      %v304 = vld [vmem:[%s1 + $0x60] sm:$0xff]
      %v305 = vld [vmem:[%s1 + $0x68] sm:$0xff]
      %v306 = vld [vmem:[%s1 + $0x70] sm:$0xff]
      %v307 = vld [vmem:[%s1 + $0x78] sm:$0xff]
      %v308 = vld [vmem:[%s2] sm:$0xff]
      %v309 = vld [vmem:[%s2 + $0x8] sm:$0xff]
      %v310 = vld [vmem:[%s2 + $0x10] sm:$0xff]
      %v311 = vld [vmem:[%s2 + $0x18] sm:$0xff]
      %v312 = vld [vmem:[%s2 + $0x20] sm:$0xff]
      %v313 = vld [vmem:[%s2 + $0x28] sm:$0xff]
      %v314 = vld [vmem:[%s2 + $0x30] sm:$0xff]
      %v315 = vld [vmem:[%s2 + $0x38] sm:$0xff]
      %v316 = vld [vmem:[%s2 + $0x40] sm:$0xff]
      %v317 = vld [vmem:[%s2 + $0x48] sm:$0xff]
      %v318 = vld [vmem:[%s2 + $0x50] sm:$0xff]
      %v319 = vld [vmem:[%s2 + $0x58] sm:$0xff]
      %v320 = vld [vmem:[%s2 + $0x60] sm:$0xff]
      %v321 = vld [vmem:[%s2 + $0x68] sm:$0xff]
      %v322 = vld [vmem:[%s2 + $0x70] sm:$0xff]
      %v323 = vld [vmem:[%s2 + $0x78] sm:$0xff]
      %v324 = vld [vmem:[%s283] sm:$0xff]
      %v325 = vld [vmem:[%s283 + $0x8] sm:$0xff]
      %v326 = vld [vmem:[%s283 + $0x10] sm:$0xff]
      %v327 = vld [vmem:[%s283 + $0x18] sm:$0xff]
      %v328 = vld [vmem:[%s283 + $0x20] sm:$0xff]
      %v329 = vld [vmem:[%s283 + $0x28] sm:$0xff]
      %v330 = vld [vmem:[%s283 + $0x30] sm:$0xff]
      %v331 = vld [vmem:[%s283 + $0x38] sm:$0xff]
      %v332 = vld [vmem:[%s283 + $0x40] sm:$0xff]
      %v333 = vld [vmem:[%s283 + $0x48] sm:$0xff]
      %v334 = vld [vmem:[%s283 + $0x50] sm:$0xff]
      %v335 = vld [vmem:[%s283 + $0x58] sm:$0xff]
      %v336 = vld [vmem:[%s283 + $0x60] sm:$0xff]
      %v337 = vld [vmem:[%s283 + $0x68] sm:$0xff]
      %v338 = vld [vmem:[%s283 + $0x70] sm:$0xff]
      %v339 = vld [vmem:[%s283 + $0x78] sm:$0xff]
      %v340 = vmul.f32 %v308, %v324
      %v341 = vmul.f32 %v309, %v325
      %v342 = vmul.f32 %v310, %v326
      %v343 = vmul.f32 %v311, %v327
      %v344 = vmul.f32 %v312, %v328
      %v345 = vmul.f32 %v313, %v329
      %v346 = vmul.f32 %v314, %v330
      %v347 = vmul.f32 %v315, %v331
      %v348 = vmul.f32 %v316, %v332
      %v349 = vmul.f32 %v317, %v333
      %v350 = vmul.f32 %v318, %v334
      %v351 = vmul.f32 %v319, %v335
      %v352 = vmul.f32 %v320, %v336
      %v353 = vmul.f32 %v321, %v337
      %v354 = vmul.f32 %v322, %v338
      %v355 = vmul.f32 %v323, %v339
      %v356 = vadd.f32 %v292, %v340
      %v357 = vadd.f32 %v293, %v341
      %v358 = vadd.f32 %v294, %v342
      %v359 = vadd.f32 %v295, %v343
      %v360 = vadd.f32 %v296, %v344
      %v361 = vadd.f32 %v297, %v345
      %v362 = vadd.f32 %v298, %v346
      %v363 = vadd.f32 %v299, %v347
      %v364 = vadd.f32 %v300, %v348
      %v365 = vadd.f32 %v301, %v349
      %v366 = vadd.f32 %v302, %v350
      %v367 = vadd.f32 %v303, %v351
      %v368 = vadd.f32 %v304, %v352
      %v369 = vadd.f32 %v305, %v353
      %v370 = vadd.f32 %v306, %v354
      %v371 = vadd.f32 %v307, %v355
      %v372 = vld [vmem:[%s3] sm:$0x1]
      %v373 = vld [vmem:[%s4] sm:$0x1]
      %v374 = vld [vmem:[%s286] sm:$0x1]
      %v375 = vmul.f32 %v373, %v374
      %v376 = vadd.f32 %v372, %v375
      %v377 = vld [vmem:[%s0] sm:$0xff]
      %v378 = vpack.c.bf16 %v377, %v377
      %v379 = vpack.c.bf16 %v357, %v356
      %v380 = vpack.c.bf16 %v359, %v358
      %v381 = vpack.c.bf16 %v361, %v360
      %v382 = vpack.c.bf16 %v363, %v362
      %v383 = vpack.c.bf16 %v365, %v364
      %v384 = vpack.c.bf16 %v367, %v366
      %v385 = vpack.c.bf16 %v369, %v368
      %v386 = vpack.c.bf16 %v371, %v370
      %v388 = vlaneseq
      %v389 = vshrl.u32 %v388, 7
      %v390 = vsub.s32 0, %v389
      %v391 = vrot.slane %v376, %v390
      %393 = vmatprep.subr.bf16.mxu0 0
      %394 = vmatpush1.bf16.msra.mxu0 %v379
      %395 = vmatprep.subr.bf16.mxu0 0
      %396 = vmatpush1.bf16.msra.mxu0 %v380
      %397 = vmatprep.subr.bf16.mxu0 0
      %398 = vmatpush1.bf16.msra.mxu0 %v381
      %399 = vmatprep.subr.bf16.mxu0 0
      %400 = vmatpush1.bf16.msra.mxu0 %v382
      %401 = vmatprep.subr.bf16.mxu0 0
      %402 = vmatpush1.bf16.msra.mxu0 %v383
      %403 = vmatprep.subr.bf16.mxu0 0
      %404 = vmatpush1.bf16.msra.mxu0 %v384
      %405 = vmatprep.subr.bf16.mxu0 0
      %406 = vmatpush1.bf16.msra.mxu0 %v385
      %407 = vmatprep.subr.bf16.mxu0 0
      %408 = vmatpush1.bf16.msra.mxu0 %v386
      %409 = vmatprep.subr.bf16.mxu0 0
      %410 = vmatpush1.bf16.msra.mxu0 0
      %411 = vmatprep.subr.bf16.mxu0 0
      %412 = vmatpush1.bf16.msra.mxu0 0
      %413 = vmatprep.subr.bf16.mxu0 0
      %414 = vmatpush1.bf16.msra.mxu0 0
      %415 = vmatprep.subr.bf16.mxu0 0
      %416 = vmatpush1.bf16.msra.mxu0 0
      %417 = vmatprep.subr.bf16.mxu0 0
      %418 = vmatpush1.bf16.msra.mxu0 0
      %419 = vmatprep.subr.bf16.mxu0 0
      %420 = vmatpush1.bf16.msra.mxu0 0
      %421 = vmatprep.subr.bf16.mxu0 0
      %422 = vmatpush1.bf16.msra.mxu0 0
      %423 = vmatprep.subr.bf16.mxu0 0
      %424 = vmatpush1.bf16.msra.mxu0 0
      %425 = vmatprep.mubr.bf16.mxu0 0
      %426 = vmatmul.mubr.bf16.gmra.mrb[0].mxu0 %v378
      %v427 = vpop.f32.mrb[0].mxu0
      %v428 = vadd.f32 %v391, %v427
      %v429 = vpop.f32.mrb[0].mxu0
      %v430 = vpop.f32.mrb[0].mxu0
      %v431 = vpop.f32.mrb[0].mxu0
      %432 = vdwg.mxu0
      %433 = vst [vmem:[%s290] sm:$0xff] %v428
      %p434 = scmp.lt.s32.totalorder %s18, 1
      %s435 = scalar_select %p434, %s18, 1
      %s436 = smul.addr %s435, 8
      %s437 = scalar_lea.vmem %s7, %s436
      // Predicated region
      $region49: #{parallel_sampling_forward.1} parent=47 // pred_check
        %p438 = pneg %p193
      $region50: #{parallel_sampling_forward.1} parent=47 // pred_check_branch
        %440 = sbr.rel (%p438) target = $region52
      $region51: #{parallel_sampling_forward.1} parent=47 // pred_region
        _
      $region52: #{parallel_sampling_forward.1} parent=47 // pred_fallthru
        _
    $region48: #{parallel_sampling_forward.1} parent=5 // pred_fallthru
      _
    %p441 = scmp.le.s32.totalorder 2, %s13
    // Predicated region
    $region53: #{parallel_sampling_forward.1} parent=5 // pred_check
      %p442 = pneg %p441
    $region54: #{parallel_sampling_forward.1} parent=5 // pred_check_branch
      %444 = sbr.rel (%p442) target = $region56
    $region55: #{parallel_sampling_forward.1} parent=5 // pred_region
      %s445 = ssub.s32 %s13, 2
      // Predicated region
      $region57: #{parallel_sampling_forward.1} parent=55 // pred_check
        %p446 = pneg %p199
      $region58: #{parallel_sampling_forward.1} parent=55 // pred_check_branch
        %448 = sbr.rel (%p446) target = $region60
      $region59: #{parallel_sampling_forward.1} parent=55 // pred_region
        %p449 = scmp.lt.s32.totalorder %s19, 1
        %s450 = scalar_select %p449, %s19, 1
        %s451 = smul.addr %s450, 8
        %s452 = scalar_lea.vmem %s7, %s451
      $region60: #{parallel_sampling_forward.1} parent=55 // pred_fallthru
        _
    $region56: #{parallel_sampling_forward.1} parent=5 // pred_fallthru
      _
  $region6: #{parallel_sampling_forward.1} parent=0 // loop_footer
    %s17 = sadd.s32 1, %s13
  $region7: #{parallel_sampling_forward.1} parent=0 // loop_footer_branch
    %12 = sbr.rel target = $region3
  $region8: #{parallel_sampling_forward.1} parent=0 // loop_exit
    _

</llo_original>
